<compile_context>
chip_gen: v7x
topology: tpu7x:2x2x1
jax: 0.10.0
libtpu: 0.0.40
codegen_flags: <defaults>
</compile_context>

<pallas_src>
import functools

import jax
import jax.numpy as jnp
from jax.experimental import pallas as pl
from jax.experimental.pallas import tpu as pltpu


def _cdiv(a, b):
    return -(-a // b)


def _round_up(a, b):
    return _cdiv(a, b) * b


def _im2col_kernel(x_ref, out_ref, *, KH, KW, PH, PW, OH, OW, H, W):
    """x_ref: (tc, H, W); out_ref: (tc, KH*KW, OH, OW).

    For every tap (kh, kw) the in-image rectangle is copied straight from the
    input tile (static shifted slice) and only the thin border strips that fall
    outside the image get explicit zero stores — no padded staging buffer.
    """
    tc = out_ref.shape[0]
    dt = out_ref.dtype
    for kh in range(KH):
        r0 = max(0, PH - kh)           # first output row whose source is in-image
        r1 = min(OH, H + PH - kh)      # one past the last in-image output row
        for kw in range(KW):
            c0 = max(0, PW - kw)
            c1 = min(OW, W + PW - kw)
            t = kh * KW + kw
            # Zero the out-of-image border strips of this tap.
            if r0 > 0:
                out_ref[:, t, :r0, :] = jnp.zeros((tc, r0, OW), dt)
            if r1 < OH:
                out_ref[:, t, r1:, :] = jnp.zeros((tc, OH - r1, OW), dt)
            if r1 > r0:
                if c0 > 0:
                    out_ref[:, t, r0:r1, :c0] = jnp.zeros((tc, r1 - r0, c0), dt)
                if c1 < OW:
                    out_ref[:, t, r0:r1, c1:] = jnp.zeros((tc, r1 - r0, OW - c1), dt)
                # Interior: direct shifted copy from the input tile.
                if c1 > c0:
                    out_ref[:, t, r0:r1, c0:c1] = x_ref[
                        :, r0 + kh - PH:r1 + kh - PH, c0 + kw - PW:c1 + kw - PW]


def _choose_tile(M, per_channel_bytes, budget_bytes):
    """Pick channel-tile size and grid length for the (N*C,) axis."""
    tc = max(1, min(M, budget_bytes // per_channel_bytes))
    if M >= 2:
        # At least 2 grid steps so both v7x TensorCores get work on the
        # single "parallel" axis (costs ~0.35 us on single-TC parts — noise).
        tc = min(tc, _cdiv(M, 2))
    steps = _cdiv(M, tc)
    if steps > 1 and steps % 2 == 1:
        steps += 1                     # even step count -> balanced 2-TC split
    tc = _cdiv(M, steps)               # rebalance block size across steps
    grid = _cdiv(M, tc)                # ragged last block is handled by Pallas
    return tc, grid


def im2col(x, kernel_size=(3, 3), stride=(1, 1), padding=(1, 1)):
    """Pallas equivalent of F.unfold(...).reshape(N, C*KH*KW, H, -1) for stride=1."""
    N, C, H, W = x.shape
    KH, KW = kernel_size
    SH, SW = stride
    PH, PW = padding
    assert (SH, SW) == (1, 1), "Pallas Im2col lowered for stride=(1,1) (CTPN usage)"
    OH = H + 2 * PH - KH + 1
    OW = W + 2 * PW - KW + 1
    KK = KH * KW
    # The module's trailing reshape to (N, C*KH*KW, h, -1) requires this.
    assert (OH * OW) % H == 0, "Im2col reshape needs OH*OW divisible by input height"
    itemsize = jnp.dtype(x.dtype).itemsize

    # Fold N and C into one blocked axis; final reshape is a contiguous relabel.
    M = N * C
    xm = x.reshape(M, H, W)

    # --- Tile sizing against the double-buffered, lane-padded VMEM footprint ---
    in_pad_bytes = _round_up(H, 8) * _round_up(W, 128) * itemsize
    out_pad_bytes = KK * _round_up(OH, 8) * _round_up(OW, 128) * itemsize
    per_channel = 2 * (in_pad_bytes + out_pad_bytes)      # 2x buffers in + out

    try:
        vmem_cap = int(pltpu.get_tpu_info().vmem_capacity_bytes)
    except Exception:
        vmem_cap = 64 * 1024 * 1024                        # conservative (v7x)
    # ~28 MiB double-buffered budget: fits v7x's 64 MiB (and the 32 MiB scoped
    # default), and on v5e/v6e keeps the grid around 8 steps so the final
    # un-overlapped output writeback stays small.
    budget = max(2 * 1024 * 1024,
                 min(28 * 1024 * 1024, vmem_cap // 2 - 4 * 1024 * 1024))

    tc, grid = _choose_tile(M, per_channel, budget)

    footprint = per_channel * tc
    vmem_limit = int(min(vmem_cap, max(32 * 1024 * 1024,
                                       footprint + 4 * 1024 * 1024)))

    in_bytes = M * H * W * itemsize
    out_bytes = M * KK * OH * OW * itemsize

    kernel = functools.partial(_im2col_kernel, KH=KH, KW=KW, PH=PH, PW=PW,
                               OH=OH, OW=OW, H=H, W=W)
    out = pl.pallas_call(
        kernel,
        out_shape=jax.ShapeDtypeStruct((M, KK, OH, OW), x.dtype),
        grid_spec=pltpu.PrefetchScalarGridSpec(
            num_scalar_prefetch=0,
            grid=(grid,),
            in_specs=[pl.BlockSpec((tc, H, W), lambda i: (i, 0, 0))],
            out_specs=pl.BlockSpec((tc, KK, OH, OW), lambda i: (i, 0, 0, 0)),
        ),
        compiler_params=pltpu.CompilerParams(
            dimension_semantics=("parallel",),
            vmem_limit_bytes=vmem_limit,
        ),
        cost_estimate=pl.CostEstimate(
            flops=0, transcendentals=0, bytes_accessed=in_bytes + out_bytes),
    )(xm)

    # (M, KK, OH, OW) -> (N, C*KK, OH*OW): contiguous relabel, no data movement.
    col = out.reshape(N, C * KK, OH * OW)
    # Module semantics: reshape to (N, C*KH*KW, h, -1) with h = input height.
    return col.reshape(N, C * KK, H, -1)


class Im2col:
    """Drop-in equivalent of net/ctpn.py::Im2col (unfold without learnable params)."""

    def __init__(self, kernel_size, stride, padding):
        self.kernel_size = tuple(kernel_size)
        self.stride = tuple(stride)
        self.padding = tuple(padding)

    def __call__(self, x):
        return im2col(x, self.kernel_size, self.stride, self.padding)


def im2col_ref(x, kernel_size=(3, 3), stride=(1, 1), padding=(1, 1)):
    """Pure-JAX reference mirroring F.unfold + reshape (for correctness checks)."""
    N, C, H, W = x.shape
    KH, KW = kernel_size
    SH, SW = stride
    PH, PW = padding
    xp = jnp.pad(x, ((0, 0), (0, 0), (PH, PH), (PW, PW)))
    OH = (H + 2 * PH - KH) // SH + 1
    OW = (W + 2 * PW - KW) // SW + 1
    pats = [xp[:, :, kh:kh + (OH - 1) * SH + 1:SH, kw:kw + (OW - 1) * SW + 1:SW]
            for kh in range(KH) for kw in range(KW)]
    col = jnp.stack(pats, axis=2).reshape(N, C * KH * KW, OH * OW)
    return col.reshape(N, C * KH * KW, H, -1)


if __name__ == "__main__":
    key = jax.random.PRNGKey(0)
    k1, k2, k3 = jax.random.split(key, 3)

    mod = Im2col((3, 3), (1, 1), (1, 1))
    fwd = jax.jit(mod.__call__)

    # Small module-consistent input (N, C, H, W).
    x = jax.random.normal(k1, (2, 4, 16, 16), jnp.float32)
    y = fwd(x)
    jax.block_until_ready(y)
    assert y.shape == (2, 4 * 9, 16, 16), y.shape
    assert bool(jnp.array_equal(y, im2col_ref(x)))

    # Awkward channel count -> ragged last grid block (cdiv path).
    x_rag = jax.random.normal(k3, (1, 5, 16, 16), jnp.float32)
    y_rag = fwd(x_rag)
    jax.block_until_ready(y_rag)
    assert y_rag.shape == (1, 5 * 9, 16, 16), y_rag.shape
    assert bool(jnp.array_equal(y_rag, im2col_ref(x_rag)))

    # CTPN-sized VGG feature map (exercises the large-tile, multi-block path).
    x_big = jax.random.normal(k2, (1, 512, 38, 57), jnp.float32)
    y_big = fwd(x_big)
    jax.block_until_ready(y_big)
    assert y_big.shape == (1, 512 * 9, 38, 57), y_big.shape
    assert bool(jnp.array_equal(y_big, im2col_ref(x_big)))

    print("KERNEL_OK")
</pallas_src>

<mosaic_0001>
module attributes {stable_mosaic.version = 11 : i64} {
  func.func @_im2col_kernel(%arg0: i32, %arg1: memref<4x16x16xf32, #tpu.memory_space<vmem>>, %arg2: memref<4x9x16x16xf32, #tpu.memory_space<vmem>>) attributes {dimension_semantics = [#tpu.dimension_semantics<parallel>], iteration_bounds = array<i64: 2>, scalar_prefetch = 0 : i64, scratch_operands = 0 : i64, tpu.core_type = #tpu.core_type<tc>, window_params = [{transform_indices = @transform_0, window_bounds = array<i64: 4, 16, 16>}, {transform_indices = @transform_1, window_bounds = array<i64: 4, 9, 16, 16>}]} {
    %cst = arith.constant 0.000000e+00 : f32
    %0 = vector.broadcast %cst : f32 to vector<4x1x16xf32>
    %c0 = arith.constant 0 : index
    %c0_0 = arith.constant 0 : index
    %c0_1 = arith.constant 0 : index
    %c0_2 = arith.constant 0 : index
    %1 = vector.load %arg2[%c0, %c0_0, %c0_1, %c0_2] : memref<4x9x16x16xf32, #tpu.memory_space<vmem>>, vector<4x1x1x16xf32>
    %2 = vector.shape_cast %1 : vector<4x1x1x16xf32> to vector<4x1x16xf32>
    %3 = vector.shape_cast %0 : vector<4x1x16xf32> to vector<4x1x1x16xf32>
    tpu.vector_store %arg2[%c0, %c0_0, %c0_1, %c0_2], %3 {strides = array<i32>} : memref<4x9x16x16xf32, #tpu.memory_space<vmem>>, vector<4x1x1x16xf32>,
    %cst_3 = arith.constant 0.000000e+00 : f32
    %4 = vector.broadcast %cst_3 : f32 to vector<4x15x1xf32>
    %c0_4 = arith.constant 0 : index
    %c0_5 = arith.constant 0 : index
    %c1 = arith.constant 1 : index
    %c0_6 = arith.constant 0 : index
    %5 = vector.load %arg2[%c0_4, %c0_5, %c1, %c0_6] : memref<4x9x16x16xf32, #tpu.memory_space<vmem>>, vector<4x1x15x1xf32>
    %6 = vector.shape_cast %5 : vector<4x1x15x1xf32> to vector<4x15x1xf32>
    %7 = vector.shape_cast %4 : vector<4x15x1xf32> to vector<4x1x15x1xf32>
    tpu.vector_store %arg2[%c0_4, %c0_5, %c1, %c0_6], %7 {strides = array<i32>} : memref<4x9x16x16xf32, #tpu.memory_space<vmem>>, vector<4x1x15x1xf32>,
    %c0_7 = arith.constant 0 : index
    %c0_8 = arith.constant 0 : index
    %c0_9 = arith.constant 0 : index
    %8 = vector.load %arg1[%c0_7, %c0_8, %c0_9] : memref<4x16x16xf32, #tpu.memory_space<vmem>>, vector<4x15x15xf32>
    %c0_10 = arith.constant 0 : index
    %c0_11 = arith.constant 0 : index
    %c1_12 = arith.constant 1 : index
    %c1_13 = arith.constant 1 : index
    %9 = vector.load %arg2[%c0_10, %c0_11, %c1_12, %c1_13] : memref<4x9x16x16xf32, #tpu.memory_space<vmem>>, vector<4x1x15x15xf32>
    %10 = vector.shape_cast %9 : vector<4x1x15x15xf32> to vector<4x15x15xf32>
    %11 = vector.shape_cast %8 : vector<4x15x15xf32> to vector<4x1x15x15xf32>
    tpu.vector_store %arg2[%c0_10, %c0_11, %c1_12, %c1_13], %11 {strides = array<i32>} : memref<4x9x16x16xf32, #tpu.memory_space<vmem>>, vector<4x1x15x15xf32>,
    %cst_14 = arith.constant 0.000000e+00 : f32
    %12 = vector.broadcast %cst_14 : f32 to vector<4x1x16xf32>
    %c0_15 = arith.constant 0 : index
    %c1_16 = arith.constant 1 : index
    %c0_17 = arith.constant 0 : index
    %c0_18 = arith.constant 0 : index
    %13 = vector.load %arg2[%c0_15, %c1_16, %c0_17, %c0_18] : memref<4x9x16x16xf32, #tpu.memory_space<vmem>>, vector<4x1x1x16xf32>
    %14 = vector.shape_cast %13 : vector<4x1x1x16xf32> to vector<4x1x16xf32>
    %15 = vector.shape_cast %12 : vector<4x1x16xf32> to vector<4x1x1x16xf32>
    tpu.vector_store %arg2[%c0_15, %c1_16, %c0_17, %c0_18], %15 {strides = array<i32>} : memref<4x9x16x16xf32, #tpu.memory_space<vmem>>, vector<4x1x1x16xf32>,
    %c0_19 = arith.constant 0 : index
    %c0_20 = arith.constant 0 : index
    %c0_21 = arith.constant 0 : index
    %16 = vector.load %arg1[%c0_19, %c0_20, %c0_21] : memref<4x16x16xf32, #tpu.memory_space<vmem>>, vector<4x15x16xf32>
    %c0_22 = arith.constant 0 : index
    %c1_23 = arith.constant 1 : index
    %c1_24 = arith.constant 1 : index
    %c0_25 = arith.constant 0 : index
    %17 = vector.load %arg2[%c0_22, %c1_23, %c1_24, %c0_25] : memref<4x9x16x16xf32, #tpu.memory_space<vmem>>, vector<4x1x15x16xf32>
    %18 = vector.shape_cast %17 : vector<4x1x15x16xf32> to vector<4x15x16xf32>
    %19 = vector.shape_cast %16 : vector<4x15x16xf32> to vector<4x1x15x16xf32>
    tpu.vector_store %arg2[%c0_22, %c1_23, %c1_24, %c0_25], %19 {strides = array<i32>} : memref<4x9x16x16xf32, #tpu.memory_space<vmem>>, vector<4x1x15x16xf32>,
    %cst_26 = arith.constant 0.000000e+00 : f32
    %20 = vector.broadcast %cst_26 : f32 to vector<4x1x16xf32>
    %c0_27 = arith.constant 0 : index
    %c2 = arith.constant 2 : index
    %c0_28 = arith.constant 0 : index
    %c0_29 = arith.constant 0 : index
    %21 = vector.load %arg2[%c0_27, %c2, %c0_28, %c0_29] : memref<4x9x16x16xf32, #tpu.memory_space<vmem>>, vector<4x1x1x16xf32>
    %22 = vector.shape_cast %21 : vector<4x1x1x16xf32> to vector<4x1x16xf32>
    %23 = vector.shape_cast %20 : vector<4x1x16xf32> to vector<4x1x1x16xf32>
    tpu.vector_store %arg2[%c0_27, %c2, %c0_28, %c0_29], %23 {strides = array<i32>} : memref<4x9x16x16xf32, #tpu.memory_space<vmem>>, vector<4x1x1x16xf32>,
    %cst_30 = arith.constant 0.000000e+00 : f32
    %24 = vector.broadcast %cst_30 : f32 to vector<4x15x1xf32>
    %c0_31 = arith.constant 0 : index
    %c2_32 = arith.constant 2 : index
    %c1_33 = arith.constant 1 : index
    %c15 = arith.constant 15 : index
    %25 = vector.load %arg2[%c0_31, %c2_32, %c1_33, %c15] : memref<4x9x16x16xf32, #tpu.memory_space<vmem>>, vector<4x1x15x1xf32>
    %26 = vector.shape_cast %25 : vector<4x1x15x1xf32> to vector<4x15x1xf32>
    %27 = vector.shape_cast %24 : vector<4x15x1xf32> to vector<4x1x15x1xf32>
    tpu.vector_store %arg2[%c0_31, %c2_32, %c1_33, %c15], %27 {strides = array<i32>} : memref<4x9x16x16xf32, #tpu.memory_space<vmem>>, vector<4x1x15x1xf32>,
    %c0_34 = arith.constant 0 : index
    %c0_35 = arith.constant 0 : index
    %c1_36 = arith.constant 1 : index
    %28 = vector.load %arg1[%c0_34, %c0_35, %c1_36] : memref<4x16x16xf32, #tpu.memory_space<vmem>>, vector<4x15x15xf32>
    %c0_37 = arith.constant 0 : index
    %c2_38 = arith.constant 2 : index
    %c1_39 = arith.constant 1 : index
    %c0_40 = arith.constant 0 : index
    %29 = vector.load %arg2[%c0_37, %c2_38, %c1_39, %c0_40] : memref<4x9x16x16xf32, #tpu.memory_space<vmem>>, vector<4x1x15x15xf32>
    %30 = vector.shape_cast %29 : vector<4x1x15x15xf32> to vector<4x15x15xf32>
    %31 = vector.shape_cast %28 : vector<4x15x15xf32> to vector<4x1x15x15xf32>
    tpu.vector_store %arg2[%c0_37, %c2_38, %c1_39, %c0_40], %31 {strides = array<i32>} : memref<4x9x16x16xf32, #tpu.memory_space<vmem>>, vector<4x1x15x15xf32>,
    %cst_41 = arith.constant 0.000000e+00 : f32
    %32 = vector.broadcast %cst_41 : f32 to vector<4x16x1xf32>
    %c0_42 = arith.constant 0 : index
    %c3 = arith.constant 3 : index
    %c0_43 = arith.constant 0 : index
    %c0_44 = arith.constant 0 : index
    %33 = vector.load %arg2[%c0_42, %c3, %c0_43, %c0_44] : memref<4x9x16x16xf32, #tpu.memory_space<vmem>>, vector<4x1x16x1xf32>
    %34 = vector.shape_cast %33 : vector<4x1x16x1xf32> to vector<4x16x1xf32>
    %35 = vector.shape_cast %32 : vector<4x16x1xf32> to vector<4x1x16x1xf32>
    tpu.vector_store %arg2[%c0_42, %c3, %c0_43, %c0_44], %35 {strides = array<i32>} : memref<4x9x16x16xf32, #tpu.memory_space<vmem>>, vector<4x1x16x1xf32>,
    %c0_45 = arith.constant 0 : index
    %c0_46 = arith.constant 0 : index
    %c0_47 = arith.constant 0 : index
    %36 = vector.load %arg1[%c0_45, %c0_46, %c0_47] : memref<4x16x16xf32, #tpu.memory_space<vmem>>, vector<4x16x15xf32>
    %c0_48 = arith.constant 0 : index
    %c3_49 = arith.constant 3 : index
    %c0_50 = arith.constant 0 : index
    %c1_51 = arith.constant 1 : index
    %37 = vector.load %arg2[%c0_48, %c3_49, %c0_50, %c1_51] : memref<4x9x16x16xf32, #tpu.memory_space<vmem>>, vector<4x1x16x15xf32>
    %38 = vector.shape_cast %37 : vector<4x1x16x15xf32> to vector<4x16x15xf32>
    %39 = vector.shape_cast %36 : vector<4x16x15xf32> to vector<4x1x16x15xf32>
    tpu.vector_store %arg2[%c0_48, %c3_49, %c0_50, %c1_51], %39 {strides = array<i32>} : memref<4x9x16x16xf32, #tpu.memory_space<vmem>>, vector<4x1x16x15xf32>,
    %c0_52 = arith.constant 0 : index
    %c0_53 = arith.constant 0 : index
    %c0_54 = arith.constant 0 : index
    %40 = vector.load %arg1[%c0_52, %c0_53, %c0_54] : memref<4x16x16xf32, #tpu.memory_space<vmem>>, vector<4x16x16xf32>
    %c0_55 = arith.constant 0 : index
    %c4 = arith.constant 4 : index
    %c0_56 = arith.constant 0 : index
    %c0_57 = arith.constant 0 : index
    %41 = vector.load %arg2[%c0_55, %c4, %c0_56, %c0_57] : memref<4x9x16x16xf32, #tpu.memory_space<vmem>>, vector<4x1x16x16xf32>
    %42 = vector.shape_cast %41 : vector<4x1x16x16xf32> to vector<4x16x16xf32>
    %43 = vector.shape_cast %40 : vector<4x16x16xf32> to vector<4x1x16x16xf32>
    tpu.vector_store %arg2[%c0_55, %c4, %c0_56, %c0_57], %43 {strides = array<i32>} : memref<4x9x16x16xf32, #tpu.memory_space<vmem>>, vector<4x1x16x16xf32>,
    %cst_58 = arith.constant 0.000000e+00 : f32
    %44 = vector.broadcast %cst_58 : f32 to vector<4x16x1xf32>
    %c0_59 = arith.constant 0 : index
    %c5 = arith.constant 5 : index
    %c0_60 = arith.constant 0 : index
    %c15_61 = arith.constant 15 : index
    %45 = vector.load %arg2[%c0_59, %c5, %c0_60, %c15_61] : memref<4x9x16x16xf32, #tpu.memory_space<vmem>>, vector<4x1x16x1xf32>
    %46 = vector.shape_cast %45 : vector<4x1x16x1xf32> to vector<4x16x1xf32>
    %47 = vector.shape_cast %44 : vector<4x16x1xf32> to vector<4x1x16x1xf32>
    tpu.vector_store %arg2[%c0_59, %c5, %c0_60, %c15_61], %47 {strides = array<i32>} : memref<4x9x16x16xf32, #tpu.memory_space<vmem>>, vector<4x1x16x1xf32>,
    %c0_62 = arith.constant 0 : index
    %c0_63 = arith.constant 0 : index
    %c1_64 = arith.constant 1 : index
    %48 = vector.load %arg1[%c0_62, %c0_63, %c1_64] : memref<4x16x16xf32, #tpu.memory_space<vmem>>, vector<4x16x15xf32>
    %c0_65 = arith.constant 0 : index
    %c5_66 = arith.constant 5 : index
    %c0_67 = arith.constant 0 : index
    %c0_68 = arith.constant 0 : index
    %49 = vector.load %arg2[%c0_65, %c5_66, %c0_67, %c0_68] : memref<4x9x16x16xf32, #tpu.memory_space<vmem>>, vector<4x1x16x15xf32>
    %50 = vector.shape_cast %49 : vector<4x1x16x15xf32> to vector<4x16x15xf32>
    %51 = vector.shape_cast %48 : vector<4x16x15xf32> to vector<4x1x16x15xf32>
    tpu.vector_store %arg2[%c0_65, %c5_66, %c0_67, %c0_68], %51 {strides = array<i32>} : memref<4x9x16x16xf32, #tpu.memory_space<vmem>>, vector<4x1x16x15xf32>,
    %cst_69 = arith.constant 0.000000e+00 : f32
    %52 = vector.broadcast %cst_69 : f32 to vector<4x1x16xf32>
    %c0_70 = arith.constant 0 : index
    %c6 = arith.constant 6 : index
    %c15_71 = arith.constant 15 : index
    %c0_72 = arith.constant 0 : index
    %53 = vector.load %arg2[%c0_70, %c6, %c15_71, %c0_72] : memref<4x9x16x16xf32, #tpu.memory_space<vmem>>, vector<4x1x1x16xf32>
    %54 = vector.shape_cast %53 : vector<4x1x1x16xf32> to vector<4x1x16xf32>
    %55 = vector.shape_cast %52 : vector<4x1x16xf32> to vector<4x1x1x16xf32>
    tpu.vector_store %arg2[%c0_70, %c6, %c15_71, %c0_72], %55 {strides = array<i32>} : memref<4x9x16x16xf32, #tpu.memory_space<vmem>>, vector<4x1x1x16xf32>,
    %cst_73 = arith.constant 0.000000e+00 : f32
    %56 = vector.broadcast %cst_73 : f32 to vector<4x15x1xf32>
    %c0_74 = arith.constant 0 : index
    %c6_75 = arith.constant 6 : index
    %c0_76 = arith.constant 0 : index
    %c0_77 = arith.constant 0 : index
    %57 = vector.load %arg2[%c0_74, %c6_75, %c0_76, %c0_77] : memref<4x9x16x16xf32, #tpu.memory_space<vmem>>, vector<4x1x15x1xf32>
    %58 = vector.shape_cast %57 : vector<4x1x15x1xf32> to vector<4x15x1xf32>
    %59 = vector.shape_cast %56 : vector<4x15x1xf32> to vector<4x1x15x1xf32>
    tpu.vector_store %arg2[%c0_74, %c6_75, %c0_76, %c0_77], %59 {strides = array<i32>} : memref<4x9x16x16xf32, #tpu.memory_space<vmem>>, vector<4x1x15x1xf32>,
    %c0_78 = arith.constant 0 : index
    %c1_79 = arith.constant 1 : index
    %c0_80 = arith.constant 0 : index
    %60 = vector.load %arg1[%c0_78, %c1_79, %c0_80] : memref<4x16x16xf32, #tpu.memory_space<vmem>>, vector<4x15x15xf32>
    %c0_81 = arith.constant 0 : index
    %c6_82 = arith.constant 6 : index
    %c0_83 = arith.constant 0 : index
    %c1_84 = arith.constant 1 : index
    %61 = vector.load %arg2[%c0_81, %c6_82, %c0_83, %c1_84] : memref<4x9x16x16xf32, #tpu.memory_space<vmem>>, vector<4x1x15x15xf32>
    %62 = vector.shape_cast %61 : vector<4x1x15x15xf32> to vector<4x15x15xf32>
    %63 = vector.shape_cast %60 : vector<4x15x15xf32> to vector<4x1x15x15xf32>
    tpu.vector_store %arg2[%c0_81, %c6_82, %c0_83, %c1_84], %63 {strides = array<i32>} : memref<4x9x16x16xf32, #tpu.memory_space<vmem>>, vector<4x1x15x15xf32>,
    %cst_85 = arith.constant 0.000000e+00 : f32
    %64 = vector.broadcast %cst_85 : f32 to vector<4x1x16xf32>
    %c0_86 = arith.constant 0 : index
    %c7 = arith.constant 7 : index
    %c15_87 = arith.constant 15 : index
    %c0_88 = arith.constant 0 : index
    %65 = vector.load %arg2[%c0_86, %c7, %c15_87, %c0_88] : memref<4x9x16x16xf32, #tpu.memory_space<vmem>>, vector<4x1x1x16xf32>
    %66 = vector.shape_cast %65 : vector<4x1x1x16xf32> to vector<4x1x16xf32>
    %67 = vector.shape_cast %64 : vector<4x1x16xf32> to vector<4x1x1x16xf32>
    tpu.vector_store %arg2[%c0_86, %c7, %c15_87, %c0_88], %67 {strides = array<i32>} : memref<4x9x16x16xf32, #tpu.memory_space<vmem>>, vector<4x1x1x16xf32>,
    %c0_89 = arith.constant 0 : index
    %c1_90 = arith.constant 1 : index
    %c0_91 = arith.constant 0 : index
    %68 = vector.load %arg1[%c0_89, %c1_90, %c0_91] : memref<4x16x16xf32, #tpu.memory_space<vmem>>, vector<4x15x16xf32>
    %c0_92 = arith.constant 0 : index
    %c7_93 = arith.constant 7 : index
    %c0_94 = arith.constant 0 : index
    %c0_95 = arith.constant 0 : index
    %69 = vector.load %arg2[%c0_92, %c7_93, %c0_94, %c0_95] : memref<4x9x16x16xf32, #tpu.memory_space<vmem>>, vector<4x1x15x16xf32>
    %70 = vector.shape_cast %69 : vector<4x1x15x16xf32> to vector<4x15x16xf32>
    %71 = vector.shape_cast %68 : vector<4x15x16xf32> to vector<4x1x15x16xf32>
    tpu.vector_store %arg2[%c0_92, %c7_93, %c0_94, %c0_95], %71 {strides = array<i32>} : memref<4x9x16x16xf32, #tpu.memory_space<vmem>>, vector<4x1x15x16xf32>,
    %cst_96 = arith.constant 0.000000e+00 : f32
    %72 = vector.broadcast %cst_96 : f32 to vector<4x1x16xf32>
    %c0_97 = arith.constant 0 : index
    %c8 = arith.constant 8 : index
    %c15_98 = arith.constant 15 : index
    %c0_99 = arith.constant 0 : index
    %73 = vector.load %arg2[%c0_97, %c8, %c15_98, %c0_99] : memref<4x9x16x16xf32, #tpu.memory_space<vmem>>, vector<4x1x1x16xf32>
    %74 = vector.shape_cast %73 : vector<4x1x1x16xf32> to vector<4x1x16xf32>
    %75 = vector.shape_cast %72 : vector<4x1x16xf32> to vector<4x1x1x16xf32>
    tpu.vector_store %arg2[%c0_97, %c8, %c15_98, %c0_99], %75 {strides = array<i32>} : memref<4x9x16x16xf32, #tpu.memory_space<vmem>>, vector<4x1x1x16xf32>,
    %cst_100 = arith.constant 0.000000e+00 : f32
    %76 = vector.broadcast %cst_100 : f32 to vector<4x15x1xf32>
    %c0_101 = arith.constant 0 : index
    %c8_102 = arith.constant 8 : index
    %c0_103 = arith.constant 0 : index
    %c15_104 = arith.constant 15 : index
    %77 = vector.load %arg2[%c0_101, %c8_102, %c0_103, %c15_104] : memref<4x9x16x16xf32, #tpu.memory_space<vmem>>, vector<4x1x15x1xf32>
    %78 = vector.shape_cast %77 : vector<4x1x15x1xf32> to vector<4x15x1xf32>
    %79 = vector.shape_cast %76 : vector<4x15x1xf32> to vector<4x1x15x1xf32>
    tpu.vector_store %arg2[%c0_101, %c8_102, %c0_103, %c15_104], %79 {strides = array<i32>} : memref<4x9x16x16xf32, #tpu.memory_space<vmem>>, vector<4x1x15x1xf32>,
    %c0_105 = arith.constant 0 : index
    %c1_106 = arith.constant 1 : index
    %c1_107 = arith.constant 1 : index
    %80 = vector.load %arg1[%c0_105, %c1_106, %c1_107] : memref<4x16x16xf32, #tpu.memory_space<vmem>>, vector<4x15x15xf32>
    %c0_108 = arith.constant 0 : index
    %c8_109 = arith.constant 8 : index
    %c0_110 = arith.constant 0 : index
    %c0_111 = arith.constant 0 : index
    %81 = vector.load %arg2[%c0_108, %c8_109, %c0_110, %c0_111] : memref<4x9x16x16xf32, #tpu.memory_space<vmem>>, vector<4x1x15x15xf32>
    %82 = vector.shape_cast %81 : vector<4x1x15x15xf32> to vector<4x15x15xf32>
    %83 = vector.shape_cast %80 : vector<4x15x15xf32> to vector<4x1x15x15xf32>
    tpu.vector_store %arg2[%c0_108, %c8_109, %c0_110, %c0_111], %83 {strides = array<i32>} : memref<4x9x16x16xf32, #tpu.memory_space<vmem>>, vector<4x1x15x15xf32>,
    return
  }
  func.func @transform_0(%arg0: i32) -> (i32, i32, i32) {
    %c0_i32 = arith.constant 0 : i32
    %c0_i32_0 = arith.constant 0 : i32
    %c0_i32_1 = arith.constant 0 : i32
    return %arg0, %c0_i32, %c0_i32_0 : i32, i32, i32
  }
  func.func @transform_1(%arg0: i32) -> (i32, i32, i32, i32) {
    %c0_i32 = arith.constant 0 : i32
    %c0_i32_0 = arith.constant 0 : i32
    %c0_i32_1 = arith.constant 0 : i32
    %c0_i32_2 = arith.constant 0 : i32
    return %arg0, %c0_i32, %c0_i32_0, %c0_i32_1 : i32, i32, i32, i32
  }
}

</mosaic_0001>

<llo_original>
// kernel: a_call__.1
$region0: #{a_call__.1}
  #allocation0 [shape = 'u32[]', space=smem, size = 0x4, offset = 0x4, fixed_abs, tag = 'smem constant byte address 0x4 - core index']
  #allocation1 [shape = 'u32[144,128]{1,0:T(1,128)}', space=vmem, size = 0x12000, scoped, tag = 'internal scratch']
  %s0 = inlined_call_operand.hbm [shape: f32[8,16,16], index: 0, kind: input, shape index: {}]
  %s1 = inlined_call_operand.vmem [shape: f32[8,9,16,16], index: 1, kind: output, shape index: {}]
  %s2 = sld [smem:[#allocation0]]
  $region41: #{a_call__.1} parent=0
    _
  %s4 = ssub.s32 1, %s2
  %s5 = scalar_select 0, %s4, %s2
  $region1: #{a_call__.1} parent=0
    #allocation2 [shape = 'u8[65536]{0}', space=vmem, size = 0x10000, scoped, tag = 'input window, operand 0']
    #allocation3 [shape = 's32[2]{0}', space=sflag, size = 0x8, scoped, tag = 'scoped memory for a_call__.1']
    %6 = vsyncpa [#allocation3], 0
    %s7 = scalar_lea.sflag [#allocation3], 1
    %8 = vsyncpa %s7, 0
    loop: start=0, step=1, limit=4
    $region2: #{a_call__.1} parent=1 // loop_pre_header
      _
    $region3: #{a_call__.1} parent=1 // loop_header
      %s10 = sphi 0, %s14
      %p11 = scmp.ge.s32.totalorder %s10, 4
      %s20 = sphi 0, %s22
      %s23 = sphi 0, %s20
      %s24 = sphi 0, %s23
      %s40 = sphi 0, %s24
      %s46 = sphi 0, %s48
      %s49 = sphi 0, %s46
      %s50 = sphi 0, %s49
      %s66 = sphi 0, %s50
    $region4: #{a_call__.1} parent=1 // loop_header_branch
      %13 = sbr.rel (%p11) target = $region8
    $region5: #{a_call__.1} parent=1 // loop_body
      %s15 = ssub.s32 %s10, 1
      %s16 = ssub.s32 %s10, 2
      %s17 = sadd.s32 %s10, 1
      %s18 = ssub.s32 %s10, %s17
      %p19 = scmp.eq.s32.totalorder %s18, 0
      %s21 = sadd.s32 %s20, 1
      %s22 = scalar_select %p19, %s20, %s21
      %p25 = pneg %p19
      %p26 = scmp.eq.s32.totalorder %s10, 1
      %p27 = por %p25, %p26
      %p28 = scmp.ne.s32.totalorder %s20, %s23
      %p29 = scmp.eq.s32.totalorder %s10, 0
      %p30 = por %p28, %p29
      %p31 = scmp.ne.s32.totalorder %s20, %s23
      %p32 = scmp.eq.s32.totalorder %s15, 1
      %p33 = por %p31, %p32
      %p34 = scmp.ne.s32.totalorder %s23, %s24
      %p35 = scmp.eq.s32.totalorder %s15, 0
      %p36 = por %p34, %p35
      %p37 = scmp.ne.s32.totalorder %s23, %s24
      %p38 = scmp.eq.s32.totalorder %s16, 1
      %p39 = por %p37, %p38
      %p41 = scmp.ne.s32.totalorder %s24, %s40
      %p42 = scmp.eq.s32.totalorder %s16, 0
      %p43 = por %p41, %p42
      %s44 = ssub.s32 %s10, %s17
      %p45 = scmp.eq.s32.totalorder %s44, 0
      %s47 = sadd.s32 %s46, 1
      %s48 = scalar_select %p45, %s46, %s47
      %p51 = pneg %p45
      %p52 = scmp.eq.s32.totalorder %s10, 1
      %p53 = por %p51, %p52
      %p54 = scmp.ne.s32.totalorder %s46, %s49
      %p55 = scmp.eq.s32.totalorder %s10, 0
      %p56 = por %p54, %p55
      %p57 = scmp.ne.s32.totalorder %s46, %s49
      %p58 = scmp.eq.s32.totalorder %s15, 1
      %p59 = por %p57, %p58
      %p60 = scmp.ne.s32.totalorder %s49, %s50
      %p61 = scmp.eq.s32.totalorder %s15, 0
      %p62 = por %p60, %p61
      %p63 = scmp.ne.s32.totalorder %s49, %s50
      %p64 = scmp.eq.s32.totalorder %s16, 1
      %p65 = por %p63, %p64
      %p67 = scmp.ne.s32.totalorder %s50, %s66
      %p68 = scmp.eq.s32.totalorder %s16, 0
      %p69 = por %p67, %p68
      %p70 = scmp.le.s32.totalorder 1, %s10
      %p71 = scmp.lt.s32.totalorder %s10, 3
      %p72 = pnand %p70, %p71
      %p73 = pneg %p72
      // Predicated region
      $region9: #{a_call__.1} parent=5 // pred_check
        _
      $region10: #{a_call__.1} parent=5 // pred_check_branch
        %75 = sbr.rel (%p72) target = $region12
      $region11: #{a_call__.1} parent=5 // pred_region
        %s76 = ssub.s32 %s10, 1
      $region12: #{a_call__.1} parent=5 // pred_fallthru
        _
      %p77 = scmp.lt.s32.totalorder %s10, 2
      // Predicated region
      $region13: #{a_call__.1} parent=5 // pred_check
        %p78 = pneg %p77
      $region14: #{a_call__.1} parent=5 // pred_check_branch
        %80 = sbr.rel (%p78) target = $region16
      $region15: #{a_call__.1} parent=5 // pred_region
        // Predicated region
        $region17: #{a_call__.1} parent=15 // pred_check
          %p81 = pneg %p30
        $region18: #{a_call__.1} parent=15 // pred_check_branch
          %83 = sbr.rel (%p81) target = $region20
        $region19: #{a_call__.1} parent=15 // pred_region
          %s84 = sand.u32 %s20, 1
          %s85 = scalar_lea.sflag [#allocation3], %s84
          %s86 = sand.u32 %s20, 1
          %s87 = smul.addr %s86, 64
          %s88 = scalar_lea.vmem [#allocation2], %s87
          %s89 = smul.u32 4, %s10
          %s91 = ssub.s32 1024, 1024
          %92 = vsyncadd %s85, %s91
          %s93 = smul.addr %s89, 2
          %s94 = smul.addr %s93, 128
          %s95 = scalar_lea.hbm %s0, %s94
          %s96 = sshll.u32 %s88, 4
          %s97 = int_to_ptr.vmem [resolvable:$true] %s96
          %102 = dma.hbm_to_vmem [thread:$0]  %s95, 1024, %s97, %s85, 128, 128, 8
        $region20: #{a_call__.1} parent=15 // pred_fallthru
          _
      $region16: #{a_call__.1} parent=5 // pred_fallthru
        _
      %p103 = scmp.le.s32.totalorder 1, %s10
      %p104 = scmp.lt.s32.totalorder %s10, 3
      %p105 = pnand %p103, %p104
      %p106 = pneg %p105
      // Predicated region
      $region21: #{a_call__.1} parent=5 // pred_check
        _
      $region22: #{a_call__.1} parent=5 // pred_check_branch
        %108 = sbr.rel (%p105) target = $region24
      $region23: #{a_call__.1} parent=5 // pred_region
        %s109 = ssub.s32 %s10, 1
        %s110 = sand.u32 %s23, 1
        %s111 = scalar_lea.sflag [#allocation3], %s110
        %s112 = sand.u32 %s23, 1
        %s113 = smul.addr %s112, 64
        %s114 = scalar_lea.vmem [#allocation2], %s113
        // Predicated region
        $region25: #{a_call__.1} parent=23 // pred_check
          %p115 = pneg %p36
        $region26: #{a_call__.1} parent=23 // pred_check_branch
          %117 = sbr.rel (%p115) target = $region28
        $region27: #{a_call__.1} parent=23 // pred_region
          %118 = dma.done %s111, 1024
        $region28: #{a_call__.1} parent=23 // pred_fallthru
          _
        %s119 = sand.u32 %s23, 1
        %s120 = scalar_lea.sflag [#allocation3], %s119
        %s121 = sand.u32 %s23, 1
        %s122 = smul.addr %s121, 64
        %s123 = scalar_lea.vmem [#allocation2], %s122
        %p124 = pneg %p36
        %p125 = pneg %p33
        %p126 = pneg %p62
        %p127 = pneg %p59
        %s128 = smul.u32 4, %s15
        %p129 = scmp.lt.s32.totalorder %s128, 7
        %s130 = scalar_select %p129, %s128, 7
        %s131 = smul.addr %s130, 18
        %s132 = smul.addr %s131, 8
        %s133 = scalar_lea.vmem %s1, %s132
        %s134 = smul.u32 4, %s15
        %s135 = smul.u32 4, %s15
        %p136 = scmp.lt.s32.totalorder %s135, 7
        %s137 = scalar_select %p136, %s135, 7
        %s138 = smul.addr %s137, 18
        %s139 = smul.addr %s138, 8
        %s140 = scalar_lea.vmem %s1, %s139
        %s141 = smul.u32 4, %s15
        %vm142 = vcmask 122880
        %143 = vst.msk [vmem:[%s140] sm:$0x1] %vm142, 0.0
        %144 = vst.msk [vmem:[%s140 + $0x90] sm:$0x1] %vm142, 0.0
        %145 = vst.msk [vmem:[%s140 + $0x120] sm:$0x1] %vm142, 0.0
        %146 = vst.msk [vmem:[%s140 + $0x1b0] sm:$0x1] %vm142, 0.0
        %vm147 = vcmask 7168
        %148 = vst.msk [vmem:[%s140 + $0x1] sm:$0xff] %vm147, 0.0
        %vm149 = vcmask 6144
        %150 = vst.msk [vmem:[%s140 + $0x9] sm:$0x7f] %vm149, 0.0
        %151 = vst.msk [vmem:[%s140 + $0x91] sm:$0xff] %vm147, 0.0
        %152 = vst.msk [vmem:[%s140 + $0x99] sm:$0x7f] %vm149, 0.0
        %153 = vst.msk [vmem:[%s140 + $0x121] sm:$0xff] %vm147, 0.0
        %154 = vst.msk [vmem:[%s140 + $0x129] sm:$0x7f] %vm149, 0.0
        %155 = vst.msk [vmem:[%s140 + $0x1b1] sm:$0xff] %vm147, 0.0
        %156 = vst.msk [vmem:[%s140 + $0x1b9] sm:$0x7f] %vm149, 0.0
        %v157 = vld [vmem:[%s114] sm:$0xff]
        %v158 = vld [vmem:[%s114 + $0x8] sm:$0x7f]
        %v159 = vld [vmem:[%s114 + $0x10] sm:$0xff]
        %v160 = vld [vmem:[%s114 + $0x18] sm:$0x7f]
        %v161 = vld [vmem:[%s114 + $0x20] sm:$0xff]
        %v162 = vld [vmem:[%s114 + $0x28] sm:$0x7f]
        %v163 = vld [vmem:[%s114 + $0x30] sm:$0xff]
        %v164 = vld [vmem:[%s114 + $0x38] sm:$0x7f]
        %173 = vrot.lane.b32.xlu0 %v157, 1
        %v174 = vpop.permute.xlu0 %173
        %175 = vrot.lane.b32.xlu0 %v158, 1
        %v176 = vpop.permute.xlu0 %175
        %177 = vrot.lane.b32.xlu0 %v159, 1
        %v178 = vpop.permute.xlu0 %177
        %179 = vrot.lane.b32.xlu0 %v160, 1
        %v180 = vpop.permute.xlu0 %179
        %181 = vrot.lane.b32.xlu0 %v161, 1
        %v182 = vpop.permute.xlu0 %181
        %183 = vrot.lane.b32.xlu0 %v162, 1
        %v184 = vpop.permute.xlu0 %183
        %185 = vrot.lane.b32.xlu0 %v163, 1
        %v186 = vpop.permute.xlu0 %185
        %187 = vrot.lane.b32.xlu0 %v164, 1
        %v188 = vpop.permute.xlu0 %187
        %vm197 = vcmask 130056
        %198 = vst.msk [vmem:[%s140 + $0x1] sm:$0xff] %vm197, %v174
        %vm199 = vcmask 129032
        %200 = vst.msk [vmem:[%s140 + $0x9] sm:$0x7f] %vm199, %v176
        %201 = vst.msk [vmem:[%s140 + $0x91] sm:$0xff] %vm197, %v178
        %202 = vst.msk [vmem:[%s140 + $0x99] sm:$0x7f] %vm199, %v180
        %203 = vst.msk [vmem:[%s140 + $0x121] sm:$0xff] %vm197, %v182
        %204 = vst.msk [vmem:[%s140 + $0x129] sm:$0x7f] %vm199, %v184
        %205 = vst.msk [vmem:[%s140 + $0x1b1] sm:$0xff] %vm197, %v186
        %206 = vst.msk [vmem:[%s140 + $0x1b9] sm:$0x7f] %vm199, %v188
        %s207 = scalar_lea.vmem %s140, 16
        %208 = vst.msk [vmem:[%s207] sm:$0x1] %vm142, 0.0
        %209 = vst.msk [vmem:[%s207 + $0x90] sm:$0x1] %vm142, 0.0
        %210 = vst.msk [vmem:[%s207 + $0x120] sm:$0x1] %vm142, 0.0
        %211 = vst.msk [vmem:[%s207 + $0x1b0] sm:$0x1] %vm142, 0.0
        %v212 = vld [vmem:[%s114] sm:$0xff]
        %v213 = vld [vmem:[%s114 + $0x8] sm:$0x7f]
        %v214 = vld [vmem:[%s114 + $0x10] sm:$0xff]
        %v215 = vld [vmem:[%s114 + $0x18] sm:$0x7f]
        %v216 = vld [vmem:[%s114 + $0x20] sm:$0xff]
        %v217 = vld [vmem:[%s114 + $0x28] sm:$0x7f]
        %v218 = vld [vmem:[%s114 + $0x30] sm:$0xff]
        %v219 = vld [vmem:[%s114 + $0x38] sm:$0x7f]
        %vm220 = vcmask 130048
        %221 = vst.msk [vmem:[%s207 + $0x1] sm:$0xff] %vm220, %v212
        %vm222 = vcmask 129024
        %223 = vst.msk [vmem:[%s207 + $0x9] sm:$0x7f] %vm222, %v213
        %224 = vst.msk [vmem:[%s207 + $0x91] sm:$0xff] %vm220, %v214
        %225 = vst.msk [vmem:[%s207 + $0x99] sm:$0x7f] %vm222, %v215
        %226 = vst.msk [vmem:[%s207 + $0x121] sm:$0xff] %vm220, %v216
        %227 = vst.msk [vmem:[%s207 + $0x129] sm:$0x7f] %vm222, %v217
        %228 = vst.msk [vmem:[%s207 + $0x1b1] sm:$0xff] %vm220, %v218
        %229 = vst.msk [vmem:[%s207 + $0x1b9] sm:$0x7f] %vm222, %v219
        %s230 = scalar_lea.vmem %s140, 32
        %231 = vst.msk [vmem:[%s230] sm:$0x1] %vm142, 0.0
        %232 = vst.msk [vmem:[%s230 + $0x90] sm:$0x1] %vm142, 0.0
        %233 = vst.msk [vmem:[%s230 + $0x120] sm:$0x1] %vm142, 0.0
        %234 = vst.msk [vmem:[%s230 + $0x1b0] sm:$0x1] %vm142, 0.0
        %vm235 = vcmask 130168
        %236 = vst.msk [vmem:[%s230 + $0x1] sm:$0xff] %vm235, 0.0
        %vm237 = vcmask 129144
        %238 = vst.msk [vmem:[%s230 + $0x9] sm:$0x7f] %vm237, 0.0
        %239 = vst.msk [vmem:[%s230 + $0x91] sm:$0xff] %vm235, 0.0
        %240 = vst.msk [vmem:[%s230 + $0x99] sm:$0x7f] %vm237, 0.0
        %241 = vst.msk [vmem:[%s230 + $0x121] sm:$0xff] %vm235, 0.0
        %242 = vst.msk [vmem:[%s230 + $0x129] sm:$0x7f] %vm237, 0.0
        %243 = vst.msk [vmem:[%s230 + $0x1b1] sm:$0xff] %vm235, 0.0
        %244 = vst.msk [vmem:[%s230 + $0x1b9] sm:$0x7f] %vm237, 0.0
        %v245 = vld [vmem:[%s114] sm:$0xff]
        %v246 = vld [vmem:[%s114 + $0x8] sm:$0x7f]
        %v247 = vld [vmem:[%s114 + $0x10] sm:$0xff]
        %v248 = vld [vmem:[%s114 + $0x18] sm:$0x7f]
        %v249 = vld [vmem:[%s114 + $0x20] sm:$0xff]
        %v250 = vld [vmem:[%s114 + $0x28] sm:$0x7f]
        %v251 = vld [vmem:[%s114 + $0x30] sm:$0xff]
        %v252 = vld [vmem:[%s114 + $0x38] sm:$0x7f]
        %261 = vrot.lane.b32.xlu0 %v245, 127
        %v262 = vpop.permute.xlu0 %261
        %263 = vrot.lane.b32.xlu0 %v246, 127
        %v264 = vpop.permute.xlu0 %263
        %265 = vrot.lane.b32.xlu0 %v247, 127
        %v266 = vpop.permute.xlu0 %265
        %267 = vrot.lane.b32.xlu0 %v248, 127
        %v268 = vpop.permute.xlu0 %267
        %269 = vrot.lane.b32.xlu0 %v249, 127
        %v270 = vpop.permute.xlu0 %269
        %271 = vrot.lane.b32.xlu0 %v250, 127
        %v272 = vpop.permute.xlu0 %271
        %273 = vrot.lane.b32.xlu0 %v251, 127
        %v274 = vpop.permute.xlu0 %273
        %275 = vrot.lane.b32.xlu0 %v252, 127
        %v276 = vpop.permute.xlu0 %275
        %vm285 = vcmask 121856
        %286 = vst.msk [vmem:[%s230 + $0x1] sm:$0xff] %vm285, %v262
        %vm287 = vcmask 120832
        %288 = vst.msk [vmem:[%s230 + $0x9] sm:$0x7f] %vm287, %v264
        %289 = vst.msk [vmem:[%s230 + $0x91] sm:$0xff] %vm285, %v266
        %290 = vst.msk [vmem:[%s230 + $0x99] sm:$0x7f] %vm287, %v268
        %291 = vst.msk [vmem:[%s230 + $0x121] sm:$0xff] %vm285, %v270
        %292 = vst.msk [vmem:[%s230 + $0x129] sm:$0x7f] %vm287, %v272
        %293 = vst.msk [vmem:[%s230 + $0x1b1] sm:$0xff] %vm285, %v274
        %294 = vst.msk [vmem:[%s230 + $0x1b9] sm:$0x7f] %vm287, %v276
        %s295 = scalar_lea.vmem %s140, 48
        %296 = vst.msk [vmem:[%s295] sm:$0xff] %vm147, 0.0
        %297 = vst.msk [vmem:[%s295 + $0x8] sm:$0xff] %vm147, 0.0
        %298 = vst.msk [vmem:[%s295 + $0x90] sm:$0xff] %vm147, 0.0
        %299 = vst.msk [vmem:[%s295 + $0x98] sm:$0xff] %vm147, 0.0
        %300 = vst.msk [vmem:[%s295 + $0x120] sm:$0xff] %vm147, 0.0
        %301 = vst.msk [vmem:[%s295 + $0x128] sm:$0xff] %vm147, 0.0
        %302 = vst.msk [vmem:[%s295 + $0x1b0] sm:$0xff] %vm147, 0.0
        %303 = vst.msk [vmem:[%s295 + $0x1b8] sm:$0xff] %vm147, 0.0
        %v304 = vld [vmem:[%s114] sm:$0xff]
        %v305 = vld [vmem:[%s114 + $0x8] sm:$0xff]
        %v306 = vld [vmem:[%s114 + $0x10] sm:$0xff]
        %v307 = vld [vmem:[%s114 + $0x18] sm:$0xff]
        %v308 = vld [vmem:[%s114 + $0x20] sm:$0xff]
        %v309 = vld [vmem:[%s114 + $0x28] sm:$0xff]
        %v310 = vld [vmem:[%s114 + $0x30] sm:$0xff]
        %v311 = vld [vmem:[%s114 + $0x38] sm:$0xff]
        %320 = vrot.lane.b32.xlu0 %v304, 1
        %v321 = vpop.permute.xlu0 %320
        %322 = vrot.lane.b32.xlu0 %v305, 1
        %v323 = vpop.permute.xlu0 %322
        %324 = vrot.lane.b32.xlu0 %v306, 1
        %v325 = vpop.permute.xlu0 %324
        %326 = vrot.lane.b32.xlu0 %v307, 1
        %v327 = vpop.permute.xlu0 %326
        %328 = vrot.lane.b32.xlu0 %v308, 1
        %v329 = vpop.permute.xlu0 %328
        %330 = vrot.lane.b32.xlu0 %v309, 1
        %v331 = vpop.permute.xlu0 %330
        %332 = vrot.lane.b32.xlu0 %v310, 1
        %v333 = vpop.permute.xlu0 %332
        %334 = vrot.lane.b32.xlu0 %v311, 1
        %v335 = vpop.permute.xlu0 %334
        %344 = vst.msk [vmem:[%s295] sm:$0xff] %vm197, %v321
        %345 = vst.msk [vmem:[%s295 + $0x8] sm:$0xff] %vm197, %v323
        %346 = vst.msk [vmem:[%s295 + $0x90] sm:$0xff] %vm197, %v325
        %347 = vst.msk [vmem:[%s295 + $0x98] sm:$0xff] %vm197, %v327
        %348 = vst.msk [vmem:[%s295 + $0x120] sm:$0xff] %vm197, %v329
        %349 = vst.msk [vmem:[%s295 + $0x128] sm:$0xff] %vm197, %v331
        %350 = vst.msk [vmem:[%s295 + $0x1b0] sm:$0xff] %vm197, %v333
        %351 = vst.msk [vmem:[%s295 + $0x1b8] sm:$0xff] %vm197, %v335
        %v352 = vld [vmem:[%s114] sm:$0xff]
        %v353 = vld [vmem:[%s114 + $0x8] sm:$0xff]
        %v354 = vld [vmem:[%s114 + $0x10] sm:$0xff]
        %v355 = vld [vmem:[%s114 + $0x18] sm:$0xff]
        %v356 = vld [vmem:[%s114 + $0x20] sm:$0xff]
        %v357 = vld [vmem:[%s114 + $0x28] sm:$0xff]
        %v358 = vld [vmem:[%s114 + $0x30] sm:$0xff]
        %v359 = vld [vmem:[%s114 + $0x38] sm:$0xff]
        %s360 = scalar_lea.vmem %s140, 64
        %361 = vst.msk [vmem:[%s360] sm:$0xff] %vm220, %v352
        %362 = vst.msk [vmem:[%s360 + $0x8] sm:$0xff] %vm220, %v353
        %363 = vst.msk [vmem:[%s360 + $0x90] sm:$0xff] %vm220, %v354
        %364 = vst.msk [vmem:[%s360 + $0x98] sm:$0xff] %vm220, %v355
        %365 = vst.msk [vmem:[%s360 + $0x120] sm:$0xff] %vm220, %v356
        %366 = vst.msk [vmem:[%s360 + $0x128] sm:$0xff] %vm220, %v357
        %367 = vst.msk [vmem:[%s360 + $0x1b0] sm:$0xff] %vm220, %v358
        %368 = vst.msk [vmem:[%s360 + $0x1b8] sm:$0xff] %vm220, %v359
        %s369 = scalar_lea.vmem %s140, 80
        %370 = vst.msk [vmem:[%s369] sm:$0xff] %vm235, 0.0
        %371 = vst.msk [vmem:[%s369 + $0x8] sm:$0xff] %vm235, 0.0
        %372 = vst.msk [vmem:[%s369 + $0x90] sm:$0xff] %vm235, 0.0
        %373 = vst.msk [vmem:[%s369 + $0x98] sm:$0xff] %vm235, 0.0
        %374 = vst.msk [vmem:[%s369 + $0x120] sm:$0xff] %vm235, 0.0
        %375 = vst.msk [vmem:[%s369 + $0x128] sm:$0xff] %vm235, 0.0
        %376 = vst.msk [vmem:[%s369 + $0x1b0] sm:$0xff] %vm235, 0.0
        %377 = vst.msk [vmem:[%s369 + $0x1b8] sm:$0xff] %vm235, 0.0
        %v378 = vld [vmem:[%s114] sm:$0xff]
        %v379 = vld [vmem:[%s114 + $0x8] sm:$0xff]
        %v380 = vld [vmem:[%s114 + $0x10] sm:$0xff]
        %v381 = vld [vmem:[%s114 + $0x18] sm:$0xff]
        %v382 = vld [vmem:[%s114 + $0x20] sm:$0xff]
        %v383 = vld [vmem:[%s114 + $0x28] sm:$0xff]
        %v384 = vld [vmem:[%s114 + $0x30] sm:$0xff]
        %v385 = vld [vmem:[%s114 + $0x38] sm:$0xff]
        %394 = vrot.lane.b32.xlu0 %v378, 127
        %v395 = vpop.permute.xlu0 %394
        %396 = vrot.lane.b32.xlu0 %v379, 127
        %v397 = vpop.permute.xlu0 %396
        %398 = vrot.lane.b32.xlu0 %v380, 127
        %v399 = vpop.permute.xlu0 %398
        %400 = vrot.lane.b32.xlu0 %v381, 127
        %v401 = vpop.permute.xlu0 %400
        %402 = vrot.lane.b32.xlu0 %v382, 127
        %v403 = vpop.permute.xlu0 %402
        %404 = vrot.lane.b32.xlu0 %v383, 127
        %v405 = vpop.permute.xlu0 %404
        %406 = vrot.lane.b32.xlu0 %v384, 127
        %v407 = vpop.permute.xlu0 %406
        %408 = vrot.lane.b32.xlu0 %v385, 127
        %v409 = vpop.permute.xlu0 %408
        %418 = vst.msk [vmem:[%s369] sm:$0xff] %vm285, %v395
        %419 = vst.msk [vmem:[%s369 + $0x8] sm:$0xff] %vm285, %v397
        %420 = vst.msk [vmem:[%s369 + $0x90] sm:$0xff] %vm285, %v399
        %421 = vst.msk [vmem:[%s369 + $0x98] sm:$0xff] %vm285, %v401
        %422 = vst.msk [vmem:[%s369 + $0x120] sm:$0xff] %vm285, %v403
        %423 = vst.msk [vmem:[%s369 + $0x128] sm:$0xff] %vm285, %v405
        %424 = vst.msk [vmem:[%s369 + $0x1b0] sm:$0xff] %vm285, %v407
        %425 = vst.msk [vmem:[%s369 + $0x1b8] sm:$0xff] %vm285, %v409
        %s426 = scalar_lea.vmem %s140, 96
        %427 = vst.msk [vmem:[%s426 + $0xf] sm:$0x1] %vm142, 0.0
        %428 = vst.msk [vmem:[%s426 + $0x9f] sm:$0x1] %vm142, 0.0
        %429 = vst.msk [vmem:[%s426 + $0x12f] sm:$0x1] %vm142, 0.0
        %430 = vst.msk [vmem:[%s426 + $0x1bf] sm:$0x1] %vm142, 0.0
        %431 = vst.msk [vmem:[%s426] sm:$0xff] %vm147, 0.0
        %432 = vst.msk [vmem:[%s426 + $0x8] sm:$0x7f] %vm149, 0.0
        %433 = vst.msk [vmem:[%s426 + $0x90] sm:$0xff] %vm147, 0.0
        %434 = vst.msk [vmem:[%s426 + $0x98] sm:$0x7f] %vm149, 0.0
        %435 = vst.msk [vmem:[%s426 + $0x120] sm:$0xff] %vm147, 0.0
        %436 = vst.msk [vmem:[%s426 + $0x128] sm:$0x7f] %vm149, 0.0
        %437 = vst.msk [vmem:[%s426 + $0x1b0] sm:$0xff] %vm147, 0.0
        %438 = vst.msk [vmem:[%s426 + $0x1b8] sm:$0x7f] %vm149, 0.0
        %v439 = vld [vmem:[%s114 + $0x1] sm:$0xff]
        %v440 = vld [vmem:[%s114 + $0x9] sm:$0x7f]
        %v441 = vld [vmem:[%s114 + $0x11] sm:$0xff]
        %v442 = vld [vmem:[%s114 + $0x19] sm:$0x7f]
        %v443 = vld [vmem:[%s114 + $0x21] sm:$0xff]
        %v444 = vld [vmem:[%s114 + $0x29] sm:$0x7f]
        %v445 = vld [vmem:[%s114 + $0x31] sm:$0xff]
        %v446 = vld [vmem:[%s114 + $0x39] sm:$0x7f]
        %455 = vrot.lane.b32.xlu0 %v439, 1
        %v456 = vpop.permute.xlu0 %455
        %457 = vrot.lane.b32.xlu0 %v440, 1
        %v458 = vpop.permute.xlu0 %457
        %459 = vrot.lane.b32.xlu0 %v441, 1
        %v460 = vpop.permute.xlu0 %459
        %461 = vrot.lane.b32.xlu0 %v442, 1
        %v462 = vpop.permute.xlu0 %461
        %463 = vrot.lane.b32.xlu0 %v443, 1
        %v464 = vpop.permute.xlu0 %463
        %465 = vrot.lane.b32.xlu0 %v444, 1
        %v466 = vpop.permute.xlu0 %465
        %467 = vrot.lane.b32.xlu0 %v445, 1
        %v468 = vpop.permute.xlu0 %467
        %469 = vrot.lane.b32.xlu0 %v446, 1
        %v470 = vpop.permute.xlu0 %469
        %479 = vst.msk [vmem:[%s426] sm:$0xff] %vm197, %v456
        %480 = vst.msk [vmem:[%s426 + $0x8] sm:$0x7f] %vm199, %v458
        %481 = vst.msk [vmem:[%s426 + $0x90] sm:$0xff] %vm197, %v460
        %482 = vst.msk [vmem:[%s426 + $0x98] sm:$0x7f] %vm199, %v462
        %483 = vst.msk [vmem:[%s426 + $0x120] sm:$0xff] %vm197, %v464
        %484 = vst.msk [vmem:[%s426 + $0x128] sm:$0x7f] %vm199, %v466
        %485 = vst.msk [vmem:[%s426 + $0x1b0] sm:$0xff] %vm197, %v468
        %486 = vst.msk [vmem:[%s426 + $0x1b8] sm:$0x7f] %vm199, %v470
        %s487 = scalar_lea.vmem %s140, 112
        %488 = vst.msk [vmem:[%s487 + $0xf] sm:$0x1] %vm142, 0.0
        %489 = vst.msk [vmem:[%s487 + $0x9f] sm:$0x1] %vm142, 0.0
        %490 = vst.msk [vmem:[%s487 + $0x12f] sm:$0x1] %vm142, 0.0
        %491 = vst.msk [vmem:[%s487 + $0x1bf] sm:$0x1] %vm142, 0.0
        %v492 = vld [vmem:[%s114 + $0x1] sm:$0xff]
        %v493 = vld [vmem:[%s114 + $0x9] sm:$0x7f]
        %v494 = vld [vmem:[%s114 + $0x11] sm:$0xff]
        %v495 = vld [vmem:[%s114 + $0x19] sm:$0x7f]
        %v496 = vld [vmem:[%s114 + $0x21] sm:$0xff]
        %v497 = vld [vmem:[%s114 + $0x29] sm:$0x7f]
        %v498 = vld [vmem:[%s114 + $0x31] sm:$0xff]
        %v499 = vld [vmem:[%s114 + $0x39] sm:$0x7f]
        %500 = vst.msk [vmem:[%s487] sm:$0xff] %vm220, %v492
        %501 = vst.msk [vmem:[%s487 + $0x8] sm:$0x7f] %vm222, %v493
        %502 = vst.msk [vmem:[%s487 + $0x90] sm:$0xff] %vm220, %v494
        %503 = vst.msk [vmem:[%s487 + $0x98] sm:$0x7f] %vm222, %v495
        %504 = vst.msk [vmem:[%s487 + $0x120] sm:$0xff] %vm220, %v496
        %505 = vst.msk [vmem:[%s487 + $0x128] sm:$0x7f] %vm222, %v497
        %506 = vst.msk [vmem:[%s487 + $0x1b0] sm:$0xff] %vm220, %v498
        %507 = vst.msk [vmem:[%s487 + $0x1b8] sm:$0x7f] %vm222, %v499
        %s508 = scalar_lea.vmem %s140, 128
        %509 = vst.msk [vmem:[%s508 + $0xf] sm:$0x1] %vm142, 0.0
        %510 = vst.msk [vmem:[%s508 + $0x9f] sm:$0x1] %vm142, 0.0
        %511 = vst.msk [vmem:[%s508 + $0x12f] sm:$0x1] %vm142, 0.0
        %512 = vst.msk [vmem:[%s508 + $0x1bf] sm:$0x1] %vm142, 0.0
        %513 = vst.msk [vmem:[%s508] sm:$0xff] %vm235, 0.0
        %514 = vst.msk [vmem:[%s508 + $0x8] sm:$0x7f] %vm237, 0.0
        %515 = vst.msk [vmem:[%s508 + $0x90] sm:$0xff] %vm235, 0.0
        %516 = vst.msk [vmem:[%s508 + $0x98] sm:$0x7f] %vm237, 0.0
        %517 = vst.msk [vmem:[%s508 + $0x120] sm:$0xff] %vm235, 0.0
        %518 = vst.msk [vmem:[%s508 + $0x128] sm:$0x7f] %vm237, 0.0
        %519 = vst.msk [vmem:[%s508 + $0x1b0] sm:$0xff] %vm235, 0.0
        %520 = vst.msk [vmem:[%s508 + $0x1b8] sm:$0x7f] %vm237, 0.0
        %v521 = vld [vmem:[%s114 + $0x1] sm:$0xff]
        %v522 = vld [vmem:[%s114 + $0x9] sm:$0x7f]
        %v523 = vld [vmem:[%s114 + $0x11] sm:$0xff]
        %v524 = vld [vmem:[%s114 + $0x19] sm:$0x7f]
        %v525 = vld [vmem:[%s114 + $0x21] sm:$0xff]
        %v526 = vld [vmem:[%s114 + $0x29] sm:$0x7f]
        %v527 = vld [vmem:[%s114 + $0x31] sm:$0xff]
        %v528 = vld [vmem:[%s114 + $0x39] sm:$0x7f]
        %537 = vrot.lane.b32.xlu0 %v521, 127
        %v538 = vpop.permute.xlu0 %537
        %539 = vrot.lane.b32.xlu0 %v522, 127
        %v540 = vpop.permute.xlu0 %539
        %541 = vrot.lane.b32.xlu0 %v523, 127
        %v542 = vpop.permute.xlu0 %541
        %543 = vrot.lane.b32.xlu0 %v524, 127
        %v544 = vpop.permute.xlu0 %543
        %545 = vrot.lane.b32.xlu0 %v525, 127
        %v546 = vpop.permute.xlu0 %545
        %547 = vrot.lane.b32.xlu0 %v526, 127
        %v548 = vpop.permute.xlu0 %547
        %549 = vrot.lane.b32.xlu0 %v527, 127
        %v550 = vpop.permute.xlu0 %549
        %551 = vrot.lane.b32.xlu0 %v528, 127
        %v552 = vpop.permute.xlu0 %551
        %561 = vst.msk [vmem:[%s508] sm:$0xff] %vm285, %v538
        %562 = vst.msk [vmem:[%s508 + $0x8] sm:$0x7f] %vm287, %v540
        %563 = vst.msk [vmem:[%s508 + $0x90] sm:$0xff] %vm285, %v542
        %564 = vst.msk [vmem:[%s508 + $0x98] sm:$0x7f] %vm287, %v544
        %565 = vst.msk [vmem:[%s508 + $0x120] sm:$0xff] %vm285, %v546
        %566 = vst.msk [vmem:[%s508 + $0x128] sm:$0x7f] %vm287, %v548
        %567 = vst.msk [vmem:[%s508 + $0x1b0] sm:$0xff] %vm285, %v550
        %568 = vst.msk [vmem:[%s508 + $0x1b8] sm:$0x7f] %vm287, %v552
        %s569 = smul.u32 4, %s15
        %p570 = scmp.lt.s32.totalorder %s569, 7
        %s571 = scalar_select %p570, %s569, 7
        %s572 = smul.addr %s571, 18
        %s573 = smul.addr %s572, 8
        %s574 = scalar_lea.vmem %s1, %s573
        // Predicated region
        $region29: #{a_call__.1} parent=23 // pred_check
          %p575 = pneg %p59
        $region30: #{a_call__.1} parent=23 // pred_check_branch
          %577 = sbr.rel (%p575) target = $region32
        $region31: #{a_call__.1} parent=23 // pred_region
          %s578 = smul.u32 4, %s15
        $region32: #{a_call__.1} parent=23 // pred_fallthru
          _
      $region24: #{a_call__.1} parent=5 // pred_fallthru
        _
      %p579 = scmp.le.s32.totalorder 2, %s10
      // Predicated region
      $region33: #{a_call__.1} parent=5 // pred_check
        %p580 = pneg %p579
      $region34: #{a_call__.1} parent=5 // pred_check_branch
        %582 = sbr.rel (%p580) target = $region36
      $region35: #{a_call__.1} parent=5 // pred_region
        %s583 = ssub.s32 %s10, 2
        // Predicated region
        $region37: #{a_call__.1} parent=35 // pred_check
          %p584 = pneg %p65
        $region38: #{a_call__.1} parent=35 // pred_check_branch
          %586 = sbr.rel (%p584) target = $region40
        $region39: #{a_call__.1} parent=35 // pred_region
          %s587 = smul.u32 4, %s16
          %p588 = scmp.lt.s32.totalorder %s587, 7
          %s589 = scalar_select %p588, %s587, 7
          %s590 = smul.addr %s589, 18
          %s591 = smul.addr %s590, 8
          %s592 = scalar_lea.vmem %s1, %s591
        $region40: #{a_call__.1} parent=35 // pred_fallthru
          _
      $region36: #{a_call__.1} parent=5 // pred_fallthru
        _
    $region6: #{a_call__.1} parent=1 // loop_footer
      %s14 = sadd.s32 1, %s10
    $region7: #{a_call__.1} parent=1 // loop_footer_branch
      %9 = sbr.rel target = $region3
    $region8: #{a_call__.1} parent=1 // loop_exit
      _
    %593 = vsyncpa [#allocation3], 1
    %s594 = scalar_lea.sflag [#allocation3], 1
    %595 = vsyncpa %s594, 1

</llo_original>
